<compile_context>
chip_gen: v7x
topology: tpu7x:2x2x1
jax: 0.10.0
libtpu: 0.0.40
codegen_flags: <defaults>
</compile_context>

<pallas_src>
import jax
import jax.numpy as jnp
from jax import lax
from jax.experimental import pallas as pl
from jax.experimental.pallas import tpu as pltpu

_SIGMOID_ONE = 0.7310585786300049  # sigmoid(1.0)


# --------------------------------------------------------------------------
# Kernels
# --------------------------------------------------------------------------

def pa_fused_kernel(gamma_ref, xref_ref, xfix_ref, o_ref):
    """Single pass per batch element: energy + softmax + sigmoid + scale-and-add."""
    xr = xref_ref[0]                                   # (C, HWp), input dtype
    xf = xfix_ref[0]                                   # (C, HWp)
    # energy[c, d] = sum_hw xr[c, hw] * xf[d, hw]  -- lane-axis contraction on the MXU,
    # f32 accumulation.  (If Mosaic ever emits a per-step vxpose here, switch to
    # pl.dot(xr, xf, trans_b=True); this form compiled cleanly.)
    energy = lax.dot_general(
        xr, xf, (((1,), (1,)), ((), ())), preferred_element_type=jnp.float32)
    # softmax(rowmax(e) - e, -1) == exp(rowmin(e) - e) / sum(...)   (shift invariance,
    # exponent <= 0 so it is numerically stable with a single reduction).
    p = jnp.exp(jnp.min(energy, axis=-1, keepdims=True) - energy)
    attn = p / jnp.sum(p, axis=-1, keepdims=True)
    s = jnp.sum(attn, axis=-1, keepdims=True)          # (C, 1), ~= 1 mathematically
    channel_scale = 1.0 / (1.0 + jnp.exp(-s))          # sigmoid
    scale = gamma_ref[0] * channel_scale + 1.0         # fold gamma and the residual add
    o_ref[0] = (scale * xr.astype(jnp.float32)).astype(o_ref.dtype)


def pa_scale_kernel(gamma_ref, xref_ref, xfix_ref, scale_ref, energy_acc):
    """Two-pass path, pass 1: accumulate energy over HW blocks, emit gamma*sigmoid(s)+1."""
    k = pl.program_id(1)

    @pl.when(k == 0)
    def _init():
        energy_acc[...] = jnp.zeros_like(energy_acc)

    energy_acc[...] += lax.dot_general(
        xref_ref[0], xfix_ref[0], (((1,), (1,)), ((), ())),
        preferred_element_type=jnp.float32)

    @pl.when(k == pl.num_programs(1) - 1)
    def _finish():
        energy = energy_acc[...]                                    # (C, C) f32
        p = jnp.exp(jnp.min(energy, axis=-1, keepdims=True) - energy)
        attn = p / jnp.sum(p, axis=-1, keepdims=True)               # softmax(dim=-1)
        s = jnp.sum(attn, axis=-1, keepdims=True)                   # (C, 1)
        channel_scale = 1.0 / (1.0 + jnp.exp(-s))                   # sigmoid
        scale_ref[0] = gamma_ref[0] * channel_scale + 1.0           # fold gamma + residual


def pa_apply_kernel(scale_ref, xref_ref, o_ref):
    """out = scale * x_ref  (residual and gamma already folded into scale)."""
    o_ref[0] = (scale_ref[0] * xref_ref[0].astype(jnp.float32)).astype(o_ref.dtype)


# --------------------------------------------------------------------------
# Wrapper helpers
# --------------------------------------------------------------------------

def _tpu_vmem_budgets():
    """(vmem_limit_bytes, per-kernel tile budget), generation-aware."""
    cap = None
    try:
        cap = int(getattr(pltpu.get_tpu_info(), "vmem_capacity_bytes", 0)) or None
    except Exception:
        cap = None
    if cap is None:
        cap = 64 * 1024 * 1024          # conservative fallback (v7x-sized)
    vmem_limit = min((cap * 3) // 4, 96 * 1024 * 1024)   # ~48 MiB v7x, ~96 MiB v5e/v6e
    tile_budget = max(vmem_limit // 4, 4 * 1024 * 1024)
    return vmem_limit, tile_budget


def _pick_hw_block(hw, c, itemsize, budget):
    """Largest multiple-of-128 divisor of hw (hw already 128-aligned) whose
    double-buffered in/out tiles fit the budget; 128 is the floor."""
    best = 128
    blk = 128
    while blk <= hw:
        if hw % blk == 0 and 4 * c * blk * itemsize <= budget:
            best = blk
        blk += 128
    return best


def _pad_lanes(x, mult=128):
    """Zero-pad the last (lane) axis to a multiple of `mult` (zeros are inert
    in the energy contraction and are sliced off the output)."""
    pad = (-x.shape[-1]) % mult
    if pad == 0:
        return x
    widths = [(0, 0)] * (x.ndim - 1) + [(0, pad)]
    return jnp.pad(x, widths)


def _apply_scale(gscale, xr_p, vmem_limit, tile_budget):
    B, C, HWp = xr_p.shape
    itemsize = jnp.dtype(xr_p.dtype).itemsize
    hw_blk = _pick_hw_block(HWp, C, itemsize, tile_budget)
    n_hw = HWp // hw_blk
    return pl.pallas_call(
        pa_apply_kernel,
        out_shape=jax.ShapeDtypeStruct((B, C, HWp), xr_p.dtype),
        grid=(B, n_hw),
        in_specs=[
            pl.BlockSpec((1, C, 1), lambda b, k: (b, 0, 0)),        # folded scale
            pl.BlockSpec((1, C, hw_blk), lambda b, k: (b, 0, k)),   # x_ref tile (lane-dense)
        ],
        out_specs=pl.BlockSpec((1, C, hw_blk), lambda b, k: (b, 0, k)),
        compiler_params=pltpu.CompilerParams(
            dimension_semantics=("parallel", "parallel"),
            vmem_limit_bytes=vmem_limit),
    )(gscale, xr_p)


# --------------------------------------------------------------------------
# Forward
# --------------------------------------------------------------------------

def pa_forward(x_fix, x_ref, gamma, *,
               exploit_softmax_identity=True, force_two_pass=False):
    assert x_fix.shape == x_ref.shape
    B, C, H, W = x_ref.shape
    HW = H * W
    dtype = x_ref.dtype
    itemsize = jnp.dtype(dtype).itemsize

    vmem_limit, tile_budget = _tpu_vmem_budgets()
    gamma_arr = jnp.asarray(gamma, jnp.float32).reshape(1)

    # Contiguous NCHW -> (B, C, HW) is a view-style reshape; pad HW lanes to 128.
    xr_p = _pad_lanes(x_ref.reshape(B, C, HW))
    HWp = xr_p.shape[-1]

    if exploit_softmax_identity:
        # Softmax rows sum to exactly 1 -> channel_scale == sigmoid(1) is a constant.
        # Skip the x_fix read, the MXU matmul and the softmax entirely.
        gscale = jnp.full((B, C, 1), 1.0, jnp.float32) * (
            gamma_arr[0] * _SIGMOID_ONE + 1.0)
        out_p = _apply_scale(gscale, xr_p, vmem_limit, tile_budget)
    else:
        xf_p = _pad_lanes(x_fix.reshape(B, C, HW))
        # Fused single pass when (2 inputs + output, double-buffered) + (C,C) fits.
        fused_bytes = 3 * 2 * C * HWp * itemsize + C * C * 4
        if (not force_two_pass) and fused_bytes <= tile_budget:
            out_p = pl.pallas_call(
                pa_fused_kernel,
                out_shape=jax.ShapeDtypeStruct((B, C, HWp), dtype),
                grid=(B,),
                in_specs=[
                    pl.BlockSpec(memory_space=pltpu.MemorySpace.SMEM),   # gamma
                    pl.BlockSpec((1, C, HWp), lambda b: (b, 0, 0)),      # x_ref
                    pl.BlockSpec((1, C, HWp), lambda b: (b, 0, 0)),      # x_fix
                ],
                out_specs=pl.BlockSpec((1, C, HWp), lambda b: (b, 0, 0)),
                compiler_params=pltpu.CompilerParams(
                    dimension_semantics=("parallel",),
                    vmem_limit_bytes=vmem_limit),
            )(gamma_arr, xr_p, xf_p)
        else:
            # Pass 1: folded scale (B, C, 1); energy accumulated in VMEM scratch
            # across the last ("arbitrary") HW grid axis.
            hw_blk = _pick_hw_block(HWp, C, itemsize, tile_budget)
            n_hw = HWp // hw_blk
            gscale = pl.pallas_call(
                pa_scale_kernel,
                out_shape=jax.ShapeDtypeStruct((B, C, 1), jnp.float32),
                grid=(B, n_hw),
                in_specs=[
                    pl.BlockSpec(memory_space=pltpu.MemorySpace.SMEM),      # gamma
                    pl.BlockSpec((1, C, hw_blk), lambda b, k: (b, 0, k)),   # x_ref tile
                    pl.BlockSpec((1, C, hw_blk), lambda b, k: (b, 0, k)),   # x_fix tile
                ],
                out_specs=pl.BlockSpec((1, C, 1), lambda b, k: (b, 0, 0)),
                scratch_shapes=[pltpu.VMEM((C, C), jnp.float32)],
                compiler_params=pltpu.CompilerParams(
                    dimension_semantics=("parallel", "arbitrary"),
                    vmem_limit_bytes=vmem_limit),
            )(gamma_arr, xr_p, xf_p)
            # Pass 2: lane-dense single multiply.
            out_p = _apply_scale(gscale, xr_p, vmem_limit, tile_budget)

    if HWp != HW:
        out_p = out_p[:, :, :HW]
    return out_p.reshape(B, C, H, W)


# --------------------------------------------------------------------------
# Plain-JAX reference mirroring the PyTorch forward exactly
# --------------------------------------------------------------------------

def pa_reference(x_fix, x_ref, gamma):
    B, C, H, W = x_ref.shape
    pr = x_ref.reshape(B, C, H * W).astype(jnp.float32)
    pf = x_fix.reshape(B, C, H * W).astype(jnp.float32)
    energy = jnp.einsum("bcn,bdn->bcd", pr, pf)
    energy_new = jnp.max(energy, axis=-1, keepdims=True) - energy
    attn = jax.nn.softmax(energy_new, axis=-1)
    channel_scale = jax.nn.sigmoid(jnp.sum(attn, axis=2))[..., None]   # (B, C, 1)
    out = (channel_scale * pr).reshape(B, C, H, W)
    return gamma * out + x_ref.astype(jnp.float32)


if __name__ == "__main__":
    B, C, H, W = 2, 4, 16, 16
    key = jax.random.PRNGKey(0)
    k1, k2 = jax.random.split(key)
    x_fix = jax.random.normal(k1, (B, C, H, W), jnp.float32)
    x_ref = jax.random.normal(k2, (B, C, H, W), jnp.float32)
    # gamma is initialised to 0 in the module; use a nonzero value so the
    # attention branch actually contributes to the tested output.
    gamma = 0.5

    ref = jax.block_until_ready(pa_reference(x_fix, x_ref, gamma))

    # Default fast path: constant channel scale (softmax rows sum to 1).
    out_fast = jax.block_until_ready(pa_forward(x_fix, x_ref, gamma))
    # Bit-faithful fused single-pass path.
    out_fused = jax.block_until_ready(
        pa_forward(x_fix, x_ref, gamma, exploit_softmax_identity=False))
    # Bit-faithful two-pass path (forced, for coverage of the large-shape route).
    out_two = jax.block_until_ready(
        pa_forward(x_fix, x_ref, gamma, exploit_softmax_identity=False,
                   force_two_pass=True))

    for out in (out_fast, out_fused, out_two):
        assert out.shape == (B, C, H, W)
        assert jnp.allclose(out, ref, atol=1e-4, rtol=1e-4), "mismatch vs reference"
    print("KERNEL_OK")
</pallas_src>

<mosaic_0001>
module attributes {stable_mosaic.version = 11 : i64} {
  func.func @pa_apply_kernel(%arg0: i32, %arg1: i32, %arg2: memref<1x4x1xf32, #tpu.memory_space<vmem>>, %arg3: memref<1x4x256xf32, #tpu.memory_space<vmem>>, %arg4: memref<1x4x256xf32, #tpu.memory_space<vmem>>) attributes {dimension_semantics = [#tpu.dimension_semantics<parallel>, #tpu.dimension_semantics<parallel>], iteration_bounds = array<i64: 2, 1>, scalar_prefetch = 0 : i64, scratch_operands = 0 : i64, tpu.core_type = #tpu.core_type<tc>, window_params = [{transform_indices = @transform_0, window_bounds = array<i64: 1, 4, 1>}, {transform_indices = @transform_1, window_bounds = array<i64: 1, 4, 256>}, {transform_indices = @transform_2, window_bounds = array<i64: 1, 4, 256>}]} {
    %c0 = arith.constant 0 : index
    %c0_0 = arith.constant 0 : index
    %c0_1 = arith.constant 0 : index
    %0 = vector.load %arg2[%c0, %c0_0, %c0_1] : memref<1x4x1xf32, #tpu.memory_space<vmem>>, vector<1x4x1xf32>
    %1 = vector.shape_cast %0 : vector<1x4x1xf32> to vector<4x1xf32>
    %c0_2 = arith.constant 0 : index
    %c0_3 = arith.constant 0 : index
    %c0_4 = arith.constant 0 : index
    %2 = vector.load %arg3[%c0_2, %c0_3, %c0_4] : memref<1x4x256xf32, #tpu.memory_space<vmem>>, vector<1x4x256xf32>
    %3 = vector.shape_cast %2 : vector<1x4x256xf32> to vector<4x256xf32>
    %4 = vector.broadcast %1 : vector<4x1xf32> to vector<4x256xf32>
    %5 = arith.mulf %4, %3 : vector<4x256xf32>
    %c0_5 = arith.constant 0 : index
    %c0_6 = arith.constant 0 : index
    %c0_7 = arith.constant 0 : index
    %6 = vector.load %arg4[%c0_5, %c0_6, %c0_7] : memref<1x4x256xf32, #tpu.memory_space<vmem>>, vector<1x4x256xf32>
    %7 = vector.shape_cast %6 : vector<1x4x256xf32> to vector<4x256xf32>
    %8 = vector.shape_cast %5 : vector<4x256xf32> to vector<1x4x256xf32>
    tpu.vector_store %arg4[%c0_5, %c0_6, %c0_7], %8 {strides = array<i32>} : memref<1x4x256xf32, #tpu.memory_space<vmem>>, vector<1x4x256xf32>,
    return
  }
  func.func @transform_0(%arg0: i32, %arg1: i32) -> (i32, i32, i32) {
    %c0_i32 = arith.constant 0 : i32
    %c0_i32_0 = arith.constant 0 : i32
    %c0_i32_1 = arith.constant 0 : i32
    return %arg0, %c0_i32, %c0_i32_0 : i32, i32, i32
  }
  func.func @transform_1(%arg0: i32, %arg1: i32) -> (i32, i32, i32) {
    %c0_i32 = arith.constant 0 : i32
    %c0_i32_0 = arith.constant 0 : i32
    return %arg0, %c0_i32, %arg1 : i32, i32, i32
  }
  func.func @transform_2(%arg0: i32, %arg1: i32) -> (i32, i32, i32) {
    %c0_i32 = arith.constant 0 : i32
    %c0_i32_0 = arith.constant 0 : i32
    return %arg0, %c0_i32, %arg1 : i32, i32, i32
  }
}

</mosaic_0001>

<llo_original>
// kernel: tpu_custom_call.1
$region0: #{tpu_custom_call.1}
  #allocation0 [shape = 'u32[]', space=smem, size = 0x4, offset = 0x4, fixed_abs, tag = 'smem constant byte address 0x4 - core index']
  #allocation1 [shape = 'u32[144,128]{1,0:T(1,128)}', space=vmem, size = 0x12000, scoped, tag = 'internal scratch']
  %s0 = inlined_call_operand.vmem [shape: f32[2,4,1], index: 0, kind: input, shape index: {}]
  %s1 = inlined_call_operand.hbm [shape: f32[2,4,256], index: 1, kind: input, shape index: {}]
  %s2 = inlined_call_operand.hbm [shape: f32[2,4,256], index: 2, kind: output, shape index: {}]
  %s3 = sld [smem:[#allocation0]]
  $region45: #{tpu_custom_call.1} parent=0
    _
  %s5 = ssub.s32 1, %s3
  %s6 = scalar_select 0, %s5, %s3
  $region1: #{tpu_custom_call.1} parent=0
    #allocation2 [shape = 'u8[8192]{0}', space=vmem, size = 0x2000, scoped, tag = 'input window, operand 1']
    #allocation3 [shape = 's32[2]{0}', space=sflag, size = 0x8, scoped, tag = 'scoped memory for tpu_custom_call.1']
    #allocation4 [shape = 's32[2]{0}', space=sflag, size = 0x8, scoped, tag = 'scoped memory for tpu_custom_call.1']
    #allocation5 [shape = 'u8[8192]{0}', space=vmem, size = 0x2000, scoped, tag = 'output window, operand 0']
    %7 = vsyncpa [#allocation3], 0
    %s8 = scalar_lea.sflag [#allocation3], 1
    %9 = vsyncpa %s8, 0
    %10 = vsyncpa [#allocation4], 0
    %s11 = scalar_lea.sflag [#allocation4], 1
    %12 = vsyncpa %s11, 0
    loop: start=0, step=1, limit=4
    $region2: #{tpu_custom_call.1} parent=1 // loop_pre_header
      _
    $region3: #{tpu_custom_call.1} parent=1 // loop_header
      %s14 = sphi 0, %s18
      %p15 = scmp.ge.s32.totalorder %s14, 4
      %s21 = sphi 0, %s33
      %s22 = sphi 0, %s29
      %s23 = sphi 0, %s21
      %s24 = sphi 0, %s22
      %s25 = sphi 0, %s23
      %s26 = sphi 0, %s24
      %s36 = sphi 0, %s38
      %s39 = sphi 0, %s36
      %s40 = sphi 0, %s39
      %s56 = sphi 0, %s40
      %s64 = sphi 0, %s66
      %s67 = sphi 0, %s64
      %s68 = sphi 0, %s67
      %s84 = sphi 0, %s68
      %s92 = sphi 0, %s94
      %s95 = sphi 0, %s92
      %s96 = sphi 0, %s95
      %s112 = sphi 0, %s96
    $region4: #{tpu_custom_call.1} parent=1 // loop_header_branch
      %17 = sbr.rel (%p15) target = $region8
    $region5: #{tpu_custom_call.1} parent=1 // loop_body
      %s19 = ssub.s32 %s14, 1
      %s20 = ssub.s32 %s14, 2
      %s27 = sadd.s32 1, %s22
      %p28 = scmp.ge.s32.totalorder %s27, 1
      %s29 = scalar_select %p28, 0, %s27
      %s30 = sadd.s32 1, %s21
      %s31 = scalar_select %p28, %s30, %s21
      %p32 = scmp.ge.s32.totalorder %s31, 2
      %s33 = scalar_select %p32, 0, %s31
      %s34 = ssub.s32 %s21, %s33
      %p35 = scmp.eq.s32.totalorder %s34, 0
      %s37 = sadd.s32 %s36, 1
      %s38 = scalar_select %p35, %s36, %s37
      %p41 = pneg %p35
      %p42 = scmp.eq.s32.totalorder %s14, 1
      %p43 = por %p41, %p42
      %p44 = scmp.ne.s32.totalorder %s36, %s39
      %p45 = scmp.eq.s32.totalorder %s14, 0
      %p46 = por %p44, %p45
      %p47 = scmp.ne.s32.totalorder %s36, %s39
      %p48 = scmp.eq.s32.totalorder %s19, 1
      %p49 = por %p47, %p48
      %p50 = scmp.ne.s32.totalorder %s39, %s40
      %p51 = scmp.eq.s32.totalorder %s19, 0
      %p52 = por %p50, %p51
      %p53 = scmp.ne.s32.totalorder %s39, %s40
      %p54 = scmp.eq.s32.totalorder %s20, 1
      %p55 = por %p53, %p54
      %p57 = scmp.ne.s32.totalorder %s40, %s56
      %p58 = scmp.eq.s32.totalorder %s20, 0
      %p59 = por %p57, %p58
      %s60 = ssub.s32 %s21, %s33
      %s61 = ssub.s32 %s22, %s29
      %s62 = sor.u32 %s60, %s61
      %p63 = scmp.eq.s32.totalorder %s62, 0
      %s65 = sadd.s32 %s64, 1
      %s66 = scalar_select %p63, %s64, %s65
      %p69 = pneg %p63
      %p70 = scmp.eq.s32.totalorder %s14, 1
      %p71 = por %p69, %p70
      %p72 = scmp.ne.s32.totalorder %s64, %s67
      %p73 = scmp.eq.s32.totalorder %s14, 0
      %p74 = por %p72, %p73
      %p75 = scmp.ne.s32.totalorder %s64, %s67
      %p76 = scmp.eq.s32.totalorder %s19, 1
      %p77 = por %p75, %p76
      %p78 = scmp.ne.s32.totalorder %s67, %s68
      %p79 = scmp.eq.s32.totalorder %s19, 0
      %p80 = por %p78, %p79
      %p81 = scmp.ne.s32.totalorder %s67, %s68
      %p82 = scmp.eq.s32.totalorder %s20, 1
      %p83 = por %p81, %p82
      %p85 = scmp.ne.s32.totalorder %s68, %s84
      %p86 = scmp.eq.s32.totalorder %s20, 0
      %p87 = por %p85, %p86
      %s88 = ssub.s32 %s21, %s33
      %s89 = ssub.s32 %s22, %s29
      %s90 = sor.u32 %s88, %s89
      %p91 = scmp.eq.s32.totalorder %s90, 0
      %s93 = sadd.s32 %s92, 1
      %s94 = scalar_select %p91, %s92, %s93
      %p97 = pneg %p91
      %p98 = scmp.eq.s32.totalorder %s14, 1
      %p99 = por %p97, %p98
      %p100 = scmp.ne.s32.totalorder %s92, %s95
      %p101 = scmp.eq.s32.totalorder %s14, 0
      %p102 = por %p100, %p101
      %p103 = scmp.ne.s32.totalorder %s92, %s95
      %p104 = scmp.eq.s32.totalorder %s19, 1
      %p105 = por %p103, %p104
      %p106 = scmp.ne.s32.totalorder %s95, %s96
      %p107 = scmp.eq.s32.totalorder %s19, 0
      %p108 = por %p106, %p107
      %p109 = scmp.ne.s32.totalorder %s95, %s96
      %p110 = scmp.eq.s32.totalorder %s20, 1
      %p111 = por %p109, %p110
      %p113 = scmp.ne.s32.totalorder %s96, %s112
      %p114 = scmp.eq.s32.totalorder %s20, 0
      %p115 = por %p113, %p114
      %p116 = scmp.le.s32.totalorder 1, %s14
      %p117 = scmp.lt.s32.totalorder %s14, 3
      %p118 = pnand %p116, %p117
      %p119 = pneg %p118
      // Predicated region
      $region9: #{tpu_custom_call.1} parent=5 // pred_check
        _
      $region10: #{tpu_custom_call.1} parent=5 // pred_check_branch
        %121 = sbr.rel (%p118) target = $region12
      $region11: #{tpu_custom_call.1} parent=5 // pred_region
        %s122 = ssub.s32 %s14, 1
      $region12: #{tpu_custom_call.1} parent=5 // pred_fallthru
        _
      %p123 = scmp.lt.s32.totalorder %s14, 2
      // Predicated region
      $region13: #{tpu_custom_call.1} parent=5 // pred_check
        %p124 = pneg %p123
      $region14: #{tpu_custom_call.1} parent=5 // pred_check_branch
        %126 = sbr.rel (%p124) target = $region16
      $region15: #{tpu_custom_call.1} parent=5 // pred_region
        // Predicated region
        $region17: #{tpu_custom_call.1} parent=15 // pred_check
          %p127 = pneg %p46
        $region18: #{tpu_custom_call.1} parent=15 // pred_check_branch
          %129 = sbr.rel (%p127) target = $region20
        $region19: #{tpu_custom_call.1} parent=15 // pred_region
          %p130 = scmp.lt.s32.totalorder %s21, 1
          %s131 = scalar_select %p130, %s21, 1
          %s132 = smul.addr %s131, 4
          %s133 = scalar_lea.vmem %s0, %s132
        $region20: #{tpu_custom_call.1} parent=15 // pred_fallthru
          _
        // Predicated region
        $region21: #{tpu_custom_call.1} parent=15 // pred_check
          %p134 = pneg %p74
        $region22: #{tpu_custom_call.1} parent=15 // pred_check_branch
          %136 = sbr.rel (%p134) target = $region24
        $region23: #{tpu_custom_call.1} parent=15 // pred_region
          %s137 = sand.u32 %s64, 1
          %s138 = scalar_lea.sflag [#allocation3], %s137
          %s139 = sand.u32 %s64, 1
          %s140 = smul.addr %s139, 8
          %s141 = scalar_lea.vmem [#allocation2], %s140
          %s142 = smul.u32 2, %s22
          %s144 = ssub.s32 128, 128
          %145 = vsyncadd %s138, %s144
          %s146 = smul.addr %s21, 2
          %s147 = sadd.s32 %s142, %s146
          %s148 = smul.addr %s147, 64
          %s149 = scalar_lea.hbm %s1, %s148
          %s151 = sshll.u32 %s141, 4
          %s152 = int_to_ptr.vmem [resolvable:$true] %s151
          %154 = dma.hbm_to_vmem [thread:$0]  %s149, 128, %s152, %s138
        $region24: #{tpu_custom_call.1} parent=15 // pred_fallthru
          _
      $region16: #{tpu_custom_call.1} parent=5 // pred_fallthru
        _
      %p155 = scmp.le.s32.totalorder 1, %s14
      %p156 = scmp.lt.s32.totalorder %s14, 3
      %p157 = pnand %p155, %p156
      %p158 = pneg %p157
      // Predicated region
      $region25: #{tpu_custom_call.1} parent=5 // pred_check
        _
      $region26: #{tpu_custom_call.1} parent=5 // pred_check_branch
        %160 = sbr.rel (%p157) target = $region28
      $region27: #{tpu_custom_call.1} parent=5 // pred_region
        %s161 = ssub.s32 %s14, 1
        %s162 = sand.u32 %s67, 1
        %s163 = scalar_lea.sflag [#allocation3], %s162
        %s164 = sand.u32 %s67, 1
        %s165 = smul.addr %s164, 8
        %s166 = scalar_lea.vmem [#allocation2], %s165
        // Predicated region
        $region29: #{tpu_custom_call.1} parent=27 // pred_check
          %p167 = pneg %p80
        $region30: #{tpu_custom_call.1} parent=27 // pred_check_branch
          %169 = sbr.rel (%p167) target = $region32
        $region31: #{tpu_custom_call.1} parent=27 // pred_region
          %170 = dma.done %s163, 128
        $region32: #{tpu_custom_call.1} parent=27 // pred_fallthru
          _
        %p171 = scmp.lt.s32.totalorder %s23, 1
        %s172 = scalar_select %p171, %s23, 1
        %s173 = smul.addr %s172, 4
        %s174 = scalar_lea.vmem %s0, %s173
        %p175 = pneg %p52
        %p176 = pneg %p49
        %s177 = sand.u32 %s67, 1
        %s178 = scalar_lea.sflag [#allocation3], %s177
        %s179 = sand.u32 %s67, 1
        %s180 = smul.addr %s179, 8
        %s181 = scalar_lea.vmem [#allocation2], %s180
        %p182 = pneg %p80
        %p183 = pneg %p77
        %p184 = pneg %p108
        %p185 = pneg %p105
        %s186 = sand.u32 %s95, 1
        %s187 = scalar_lea.sflag [#allocation4], %s186
        %s188 = sand.u32 %s95, 1
        %s189 = smul.addr %s188, 8
        %s190 = scalar_lea.vmem [#allocation5], %s189
        %p191 = scmp.lt.s32.totalorder %s23, 1
        %s192 = scalar_select %p191, %s23, 1
        %s193 = smul.addr %s192, 4
        %s194 = scalar_lea.vmem %s0, %s193
        %s195 = smul.u32 2, %s24
        %s196 = smul.u32 2, %s24
        %v197 = vld [vmem:[%s194] sm:$0xf]
        %v198 = vld [vmem:[%s166] sm:$0xff]
        %200 = vset.pattern.permute.xlu0 0
        %201 = vperm.xlu0 %200, %v197
        %v202 = vpop.permute.xlu0 %201
        %v205 = vcombine.high %v198, %v198
        %v207 = vmul.f32 %v202, %v198
        %v208 = vmul.f32 %v202, %v205
        %v211 = vcombine.low %v207, %v208
        %213 = vst [vmem:[%s190] sm:$0xff] %v211
        %s214 = sand.u32 %s95, 1
        %s215 = scalar_lea.sflag [#allocation4], %s214
        %s216 = sand.u32 %s95, 1
        %s217 = smul.addr %s216, 8
        %s218 = scalar_lea.vmem [#allocation5], %s217
        // Predicated region
        $region33: #{tpu_custom_call.1} parent=27 // pred_check
          %p219 = pneg %p105
        $region34: #{tpu_custom_call.1} parent=27 // pred_check_branch
          %221 = sbr.rel (%p219) target = $region36
        $region35: #{tpu_custom_call.1} parent=27 // pred_region
          %s222 = smul.u32 2, %s24
          %s224 = ssub.s32 128, 128
          %225 = vsyncadd %s215, %s224
          %s226 = smul.addr %s23, 2
          %s227 = sadd.s32 %s222, %s226
          %s228 = smul.addr %s227, 64
          %s229 = scalar_lea.hbm %s2, %s228
          %s231 = sshll.u32 %s218, 4
          %s232 = int_to_ptr.vmem [resolvable:$true] %s231
          %234 = dma.vmem_to_hbm [thread:$0]  %s232, 128, %s229, %s215
        $region36: #{tpu_custom_call.1} parent=27 // pred_fallthru
          _
      $region28: #{tpu_custom_call.1} parent=5 // pred_fallthru
        _
      %p235 = scmp.le.s32.totalorder 2, %s14
      // Predicated region
      $region37: #{tpu_custom_call.1} parent=5 // pred_check
        %p236 = pneg %p235
      $region38: #{tpu_custom_call.1} parent=5 // pred_check_branch
        %238 = sbr.rel (%p236) target = $region40
      $region39: #{tpu_custom_call.1} parent=5 // pred_region
        %s239 = ssub.s32 %s14, 2
        // Predicated region
        $region41: #{tpu_custom_call.1} parent=39 // pred_check
          %p240 = pneg %p111
        $region42: #{tpu_custom_call.1} parent=39 // pred_check_branch
          %242 = sbr.rel (%p240) target = $region44
        $region43: #{tpu_custom_call.1} parent=39 // pred_region
          %s243 = sand.u32 %s96, 1
          %s244 = scalar_lea.sflag [#allocation4], %s243
          %s245 = sand.u32 %s96, 1
          %s246 = smul.addr %s245, 8
          %s247 = scalar_lea.vmem [#allocation5], %s246
          %248 = dma.done %s244, 128
        $region44: #{tpu_custom_call.1} parent=39 // pred_fallthru
          _
      $region40: #{tpu_custom_call.1} parent=5 // pred_fallthru
        _
    $region6: #{tpu_custom_call.1} parent=1 // loop_footer
      %s18 = sadd.s32 1, %s14
    $region7: #{tpu_custom_call.1} parent=1 // loop_footer_branch
      %13 = sbr.rel target = $region3
    $region8: #{tpu_custom_call.1} parent=1 // loop_exit
      _
    %249 = vsyncpa [#allocation3], 1
    %s250 = scalar_lea.sflag [#allocation3], 1
    %251 = vsyncpa %s250, 1
    %252 = vsyncpa [#allocation4], 1
    %s253 = scalar_lea.sflag [#allocation4], 1
    %254 = vsyncpa %s253, 1

</llo_original>
